<compile_context>
chip_gen: v6e
topology: v6e:2x2x1
jax: 0.10.0
libtpu: 0.0.40
codegen_flags: <defaults>
</compile_context>

<pallas_src>
import functools

import jax
import jax.numpy as jnp
from jax.experimental import pallas as pl
from jax.experimental.pallas import tpu as pltpu


def _round_up(x, m):
    return (x + m - 1) // m * m


def lstm_model_kernel(x_ref, p_ref, out_ref, *, hidden, in_rows, out_w):
    """Whole forward pass; all operands VMEM resident.

    Packed-parameter row layout (lane width LW == 4*hidden == 128):
      [0 , IP)         W0 : layer0 gate weights, columns [i | o | g | o]
      [IP, IP+LW)      W1 : layer1 gate weights, rows >= H are ZERO
      [.. , +LW)       Wfc1 padded to (LW, LW)   (rows >= H zero)
      [.. , +LW)       Wfc2 padded to (LW, LW)   (rows >= dense_hidden zero)
      last 8 rows      bg0, bg1, bfc1, bfc2, pre_scale, post_scale, post_offset, 0
    """
    H = hidden
    LW = p_ref.shape[1]                 # 128 lanes == 4*H

    r_w0 = 0
    r_w1 = r_w0 + in_rows
    r_f1 = r_w1 + LW
    r_f2 = r_f1 + LW
    r_b = r_f2 + LW

    bias = p_ref[r_b:r_b + 8, :]        # (8, LW), one sublane-block load
    bg0, bg1 = bias[0:1, :], bias[1:2, :]
    bfc1, bfc2 = bias[2:3, :], bias[3:4, :]
    pre, ps, po = bias[4:5, :], bias[5:6, :], bias[6:7, :]

    def lstm_cell(inp, w, b):
        # h_prev = c_prev = 0  =>  W_hh terms and the forget gate are inert.
        gates = jnp.dot(inp, w, preferred_element_type=jnp.float32) + b
        # One tanh pass performs both nonlinearities:
        #   sigmoid lanes (i/o groups): 0.5*tanh(0.5*x)+0.5 == sigmoid(x)
        #   tanh lanes    (g group)   : 1.0*tanh(1.0*x)+0.0
        act = jnp.tanh(gates * pre) * ps + po          # lanes: [i | o | g | o]
        # Half-lane roll (shift == LW//2, self-inverse) aligns g with i, so
        # groups 0 and 2 hold i*g.
        c_like = act * pltpu.roll(act, shift=2 * H, axis=1)
        t = jnp.tanh(c_like)                           # tanh(i*g) on groups 0,2
        # Quarter-lane roll: o lives in BOTH neighbour groups (1 and 3), so
        # groups 0,2 receive o regardless of the roll direction convention.
        # Lanes [0,H) (and a copy at [2H,3H)) hold h = o*tanh(i*g); the other
        # lanes are finite junk that only ever meets zero weight rows.
        return pltpu.roll(act, shift=H, axis=1) * t

    x = x_ref[...]
    h1 = lstm_cell(x, p_ref[r_w0:r_w1, :], bg0)
    h2 = lstm_cell(h1, p_ref[r_w1:r_f1, :], bg1)       # W1 rows >= H are zero

    z1 = jnp.dot(h2, p_ref[r_f1:r_f2, :],
                 preferred_element_type=jnp.float32) + bfc1
    z1 = jnp.maximum(z1, 0.0)                          # ReLU (dropout = identity)
    z2 = jnp.dot(z1, p_ref[r_f2:r_b, :],
                 preferred_element_type=jnp.float32) + bfc2
    # Final sigmoid via tanh; store only the narrow real-output lanes.
    out_ref[...] = 0.5 * jnp.tanh(0.5 * z2[:, :out_w]) + 0.5


def _choose_block_b(batch, requested=None):
    rows = _round_up(batch, 8)
    if requested is not None:
        blk = min(_round_up(requested, 8), rows)
    else:
        blk = min(1024, rows)
    # v7x megacore: give the "parallel" batch axis >= 2 grid steps when possible.
    if rows >= 16 and blk >= rows:
        blk = _round_up(rows // 2, 8)
    return blk


def lstm_model_forward(x, packed, *, hidden, output_size, block_b=None):
    batch, feat = x.shape
    LW = packed.shape[1]
    assert LW == 4 * hidden, "packed lane width must equal 4*hidden"
    IP = _round_up(feat, 8)
    assert packed.shape[0] == IP + 3 * LW + 8, "unexpected packed layout"
    OW = min(_round_up(output_size, 8), LW)            # narrow lane-masked output

    if IP != feat:
        x = jnp.pad(x, ((0, 0), (0, IP - feat)))

    blk = _choose_block_b(batch, block_b)
    padded_b = _round_up(batch, blk)
    if padded_b != batch:
        x = jnp.pad(x, ((0, padded_b - batch), (0, 0)))

    grid = (padded_b // blk,)
    # Executed MXU/EUP/HBM work for the packed layout.
    flops = 2 * padded_b * (IP * LW + 3 * LW * LW)
    transcendentals = padded_b * (4 * LW + OW)
    bytes_accessed = 4 * (padded_b * IP + int(packed.size) + padded_b * OW)

    out = pl.pallas_call(
        functools.partial(lstm_model_kernel, hidden=hidden, in_rows=IP,
                          out_w=OW),
        out_shape=jax.ShapeDtypeStruct((padded_b, OW), jnp.float32),
        grid_spec=pltpu.PrefetchScalarGridSpec(
            num_scalar_prefetch=0,
            grid=grid,
            in_specs=[
                pl.BlockSpec((blk, IP), lambda i: (i, 0)),
                pl.BlockSpec(packed.shape, lambda i: (0, 0)),  # resident params
            ],
            out_specs=pl.BlockSpec((blk, OW), lambda i: (i, 0)),
        ),
        compiler_params=pltpu.CompilerParams(
            dimension_semantics=("parallel",)),
        cost_estimate=pl.CostEstimate(
            flops=flops, transcendentals=transcendentals,
            bytes_accessed=bytes_accessed),
    )(x, packed)
    return out[:batch, :output_size]


def init_params(key, input_size, hidden, dense_hidden, output_size):
    """PyTorch-style uniform(-1/sqrt(fan), 1/sqrt(fan)) init (weights stored
    transposed as (in_features, out_features); LSTM gate order [i, f, g, o])."""
    keys = jax.random.split(key, 10)
    k = iter(keys)

    def u(rng, shape, fan):
        bound = 1.0 / jnp.sqrt(jnp.float32(fan))
        return jax.random.uniform(rng, shape, jnp.float32, -bound, bound)

    H = hidden
    p = {}
    p["wih0"] = u(next(k), (input_size, 4 * H), H)
    p["b0"] = u(next(k), (4 * H,), H) + u(next(k), (4 * H,), H)   # b_ih + b_hh
    p["wih1"] = u(next(k), (H, 4 * H), H)
    p["b1"] = u(next(k), (4 * H,), H) + u(next(k), (4 * H,), H)
    p["wfc1"] = u(next(k), (H, dense_hidden), H)
    p["bfc1"] = u(next(k), (dense_hidden,), H)
    p["wfc2"] = u(next(k), (dense_hidden, output_size), dense_hidden)
    p["bfc2"] = u(next(k), (output_size,), dense_hidden)
    return p


def pack_params(p, input_size, hidden, dense_hidden, output_size):
    """Host-side packing of all parameters into one (R, 128) f32 buffer.

    IMPORTANT: the kernel's junk-lane scheme relies on jnp.pad ZERO-filling
    every row >= the real row count of W1 / Wfc1 / Wfc2 (junk lanes of the
    previous activation must only meet zero weight rows).
    """
    H = hidden
    LW = 4 * H
    assert LW == 128, "kernel layout assumes 4*hidden == 128 lanes"
    assert dense_hidden <= LW and output_size <= LW
    IP = _round_up(input_size, 8)

    def gate_cols(w):
        # PyTorch gate order [i, f, g, o]; f is inert (zero c_prev).
        # Duplicate o into the dead f slot: [i | o | g | o].
        return jnp.concatenate(
            [w[:, 0:H], w[:, 3 * H:4 * H], w[:, 2 * H:3 * H], w[:, 3 * H:4 * H]],
            axis=1)

    def gate_bias(b):
        return jnp.concatenate(
            [b[0:H], b[3 * H:4 * H], b[2 * H:3 * H], b[3 * H:4 * H]])

    w0 = gate_cols(p["wih0"])                 # (input_size, LW)
    w1 = gate_cols(p["wih1"])                 # (H, LW)
    bg0, bg1 = gate_bias(p["b0"]), gate_bias(p["b1"])

    def pad2(a, rows, cols=LW):
        # zero-fill: required by the junk-lane argument above.
        return jnp.pad(a, ((0, rows - a.shape[0]), (0, cols - a.shape[1])))

    def pad_row(v):
        return jnp.pad(v, (0, LW - v.shape[0]))[None, :]

    # Per-lane activation constants: sigmoid lanes (groups 0,1,3) use
    # 0.5*tanh(0.5*x)+0.5; tanh lanes (group 2) use 1.0*tanh(1.0*x)+0.0.
    lane = jnp.arange(LW)
    is_g = (lane >= 2 * H) & (lane < 3 * H)
    pre = jnp.where(is_g, 1.0, 0.5).astype(jnp.float32)
    post_scale = pre
    post_offset = jnp.where(is_g, 0.0, 0.5).astype(jnp.float32)

    bias_block = jnp.concatenate(
        [pad_row(bg0), pad_row(bg1), pad_row(p["bfc1"]), pad_row(p["bfc2"]),
         pre[None, :], post_scale[None, :], post_offset[None, :],
         jnp.zeros((1, LW), jnp.float32)], axis=0)

    packed = jnp.concatenate(
        [pad2(w0, IP),
         pad2(w1, LW),                        # rows >= H are zero (junk lanes)
         pad2(p["wfc1"], LW),                 # rows >= H are zero
         pad2(p["wfc2"], LW),                 # rows >= dense_hidden are zero
         bias_block], axis=0).astype(jnp.float32)
    assert packed.shape == (IP + 3 * LW + 8, LW)
    return packed


def reference_forward(x, p, hidden):
    """Pure-JAX reference mirroring the PyTorch forward (eval, zero states)."""
    H = hidden

    def cell(inp, w, b):
        gates = inp @ w + b                 # h_prev = 0 => no W_hh term
        i = jax.nn.sigmoid(gates[:, 0 * H:1 * H])
        g = jnp.tanh(gates[:, 2 * H:3 * H])
        o = jax.nn.sigmoid(gates[:, 3 * H:4 * H])
        c = i * g                           # c_prev = 0 => forget gate inert
        return o * jnp.tanh(c)

    h2 = cell(cell(x, p["wih0"], p["b0"]), p["wih1"], p["b1"])
    z1 = jnp.maximum(h2 @ p["wfc1"] + p["bfc1"], 0.0)
    return jax.nn.sigmoid(z1 @ p["wfc2"] + p["bfc2"])


if __name__ == "__main__":
    batch = 8
    input_size = 16
    lstm_hidden_size = 32
    dense_hidden_size = 64
    output_size = 4

    key = jax.random.PRNGKey(0)
    kx, kp = jax.random.split(key)
    x = jax.random.normal(kx, (batch, input_size), jnp.float32)
    params = init_params(kp, input_size, lstm_hidden_size,
                         dense_hidden_size, output_size)
    packed = pack_params(params, input_size, lstm_hidden_size,
                         dense_hidden_size, output_size)

    out = lstm_model_forward(x, packed, hidden=lstm_hidden_size,
                             output_size=output_size)
    out = jax.block_until_ready(out)

    ref = reference_forward(x, params, lstm_hidden_size)
    assert out.shape == (batch, output_size)
    assert jnp.allclose(out, ref, atol=1e-5, rtol=1e-5)
    print("KERNEL_OK")
</pallas_src>

<mosaic_0001>
module attributes {stable_mosaic.version = 11 : i64} {
  func.func @lstm_model_kernel(%arg0: i32, %arg1: memref<8x16xf32, #tpu.memory_space<vmem>>, %arg2: memref<408x128xf32, #tpu.memory_space<vmem>>, %arg3: memref<8x8xf32, #tpu.memory_space<vmem>>) attributes {dimension_semantics = [#tpu.dimension_semantics<parallel>], iteration_bounds = array<i64: 1>, scalar_prefetch = 0 : i64, scratch_operands = 0 : i64, tpu.core_type = #tpu.core_type<tc>, window_params = [{transform_indices = @transform_0, window_bounds = array<i64: 8, 16>}, {pipeline_mode = #tpu.pipeline_mode<synchronous>, transform_indices = @transform_1, window_bounds = array<i64: 408, 128>}, {transform_indices = @transform_2, window_bounds = array<i64: 8, 8>}]} {
    %c400 = arith.constant 400 : index
    %c0 = arith.constant 0 : index
    %0 = vector.load %arg2[%c400, %c0] : memref<408x128xf32, #tpu.memory_space<vmem>>, vector<8x128xf32>
    %1 = vector.extract_strided_slice %0 {offsets = [0, 0], sizes = [1, 128], strides = [1, 1]} : vector<8x128xf32> to vector<1x128xf32>
    %2 = vector.extract_strided_slice %0 {offsets = [1, 0], sizes = [1, 128], strides = [1, 1]} : vector<8x128xf32> to vector<1x128xf32>
    %3 = vector.extract_strided_slice %0 {offsets = [2, 0], sizes = [1, 128], strides = [1, 1]} : vector<8x128xf32> to vector<1x128xf32>
    %4 = vector.extract_strided_slice %0 {offsets = [3, 0], sizes = [1, 128], strides = [1, 1]} : vector<8x128xf32> to vector<1x128xf32>
    %5 = vector.extract_strided_slice %0 {offsets = [4, 0], sizes = [1, 128], strides = [1, 1]} : vector<8x128xf32> to vector<1x128xf32>
    %6 = vector.extract_strided_slice %0 {offsets = [5, 0], sizes = [1, 128], strides = [1, 1]} : vector<8x128xf32> to vector<1x128xf32>
    %7 = vector.extract_strided_slice %0 {offsets = [6, 0], sizes = [1, 128], strides = [1, 1]} : vector<8x128xf32> to vector<1x128xf32>
    %c0_0 = arith.constant 0 : index
    %c0_1 = arith.constant 0 : index
    %8 = vector.load %arg1[%c0_0, %c0_1] : memref<8x16xf32, #tpu.memory_space<vmem>>, vector<8x16xf32>
    %c0_2 = arith.constant 0 : index
    %c0_3 = arith.constant 0 : index
    %9 = vector.load %arg2[%c0_2, %c0_3] : memref<408x128xf32, #tpu.memory_space<vmem>>, vector<16x128xf32>
    %cst = arith.constant dense<0.000000e+00> : vector<8x128xf32>
    %10 = tpu.matmul %8, %9, %cst {dimension_numbers = #tpu.dot_dimension_numbers<[1], [0], [0], [1], [0, 0, 1, 1], [], []>} : vector<8x16xf32>, vector<16x128xf32>, vector<8x128xf32> -> vector<8x128xf32>
    %11 = vector.broadcast %1 : vector<1x128xf32> to vector<8x128xf32>
    %12 = arith.addf %10, %11 : vector<8x128xf32>
    %13 = vector.broadcast %5 : vector<1x128xf32> to vector<8x128xf32>
    %14 = arith.mulf %12, %13 : vector<8x128xf32>
    %15 = math.tanh %14 : vector<8x128xf32>
    %16 = vector.broadcast %6 : vector<1x128xf32> to vector<8x128xf32>
    %17 = arith.mulf %15, %16 : vector<8x128xf32>
    %18 = vector.broadcast %7 : vector<1x128xf32> to vector<8x128xf32>
    %19 = arith.addf %17, %18 : vector<8x128xf32>
    %c64_i32 = arith.constant 64 : i32
    %20 = tpu.dynamic_rotate %19 by %c64_i32 dim 1 : vector<8x128xf32>, i32 -> vector<8x128xf32>
    %21 = arith.mulf %19, %20 : vector<8x128xf32>
    %22 = math.tanh %21 : vector<8x128xf32>
    %c32_i32 = arith.constant 32 : i32
    %23 = tpu.dynamic_rotate %19 by %c32_i32 dim 1 : vector<8x128xf32>, i32 -> vector<8x128xf32>
    %24 = arith.mulf %23, %22 : vector<8x128xf32>
    %c16 = arith.constant 16 : index
    %c0_4 = arith.constant 0 : index
    %25 = vector.load %arg2[%c16, %c0_4] : memref<408x128xf32, #tpu.memory_space<vmem>>, vector<128x128xf32>
    %cst_5 = arith.constant dense<0.000000e+00> : vector<8x128xf32>
    %26 = tpu.matmul %24, %25, %cst_5 {dimension_numbers = #tpu.dot_dimension_numbers<[1], [0], [0], [1], [0, 0, 1, 1], [], []>} : vector<8x128xf32>, vector<128x128xf32>, vector<8x128xf32> -> vector<8x128xf32>
    %27 = vector.broadcast %2 : vector<1x128xf32> to vector<8x128xf32>
    %28 = arith.addf %26, %27 : vector<8x128xf32>
    %29 = vector.broadcast %5 : vector<1x128xf32> to vector<8x128xf32>
    %30 = arith.mulf %28, %29 : vector<8x128xf32>
    %31 = math.tanh %30 : vector<8x128xf32>
    %32 = vector.broadcast %6 : vector<1x128xf32> to vector<8x128xf32>
    %33 = arith.mulf %31, %32 : vector<8x128xf32>
    %34 = vector.broadcast %7 : vector<1x128xf32> to vector<8x128xf32>
    %35 = arith.addf %33, %34 : vector<8x128xf32>
    %c64_i32_6 = arith.constant 64 : i32
    %36 = tpu.dynamic_rotate %35 by %c64_i32_6 dim 1 : vector<8x128xf32>, i32 -> vector<8x128xf32>
    %37 = arith.mulf %35, %36 : vector<8x128xf32>
    %38 = math.tanh %37 : vector<8x128xf32>
    %c32_i32_7 = arith.constant 32 : i32
    %39 = tpu.dynamic_rotate %35 by %c32_i32_7 dim 1 : vector<8x128xf32>, i32 -> vector<8x128xf32>
    %40 = arith.mulf %39, %38 : vector<8x128xf32>
    %c144 = arith.constant 144 : index
    %c0_8 = arith.constant 0 : index
    %41 = vector.load %arg2[%c144, %c0_8] : memref<408x128xf32, #tpu.memory_space<vmem>>, vector<128x128xf32>
    %cst_9 = arith.constant dense<0.000000e+00> : vector<8x128xf32>
    %42 = tpu.matmul %40, %41, %cst_9 {dimension_numbers = #tpu.dot_dimension_numbers<[1], [0], [0], [1], [0, 0, 1, 1], [], []>} : vector<8x128xf32>, vector<128x128xf32>, vector<8x128xf32> -> vector<8x128xf32>
    %43 = vector.broadcast %3 : vector<1x128xf32> to vector<8x128xf32>
    %44 = arith.addf %42, %43 : vector<8x128xf32>
    %cst_10 = arith.constant 0.000000e+00 : f32
    %45 = vector.broadcast %cst_10 : f32 to vector<8x128xf32>
    %46 = arith.maximumf %44, %45 : vector<8x128xf32>
    %c272 = arith.constant 272 : index
    %c0_11 = arith.constant 0 : index
    %47 = vector.load %arg2[%c272, %c0_11] : memref<408x128xf32, #tpu.memory_space<vmem>>, vector<128x128xf32>
    %cst_12 = arith.constant dense<0.000000e+00> : vector<8x128xf32>
    %48 = tpu.matmul %46, %47, %cst_12 {dimension_numbers = #tpu.dot_dimension_numbers<[1], [0], [0], [1], [0, 0, 1, 1], [], []>} : vector<8x128xf32>, vector<128x128xf32>, vector<8x128xf32> -> vector<8x128xf32>
    %49 = vector.broadcast %4 : vector<1x128xf32> to vector<8x128xf32>
    %50 = arith.addf %48, %49 : vector<8x128xf32>
    %51 = vector.extract_strided_slice %50 {offsets = [0, 0], sizes = [8, 8], strides = [1, 1]} : vector<8x128xf32> to vector<8x8xf32>
    %cst_13 = arith.constant 5.000000e-01 : f32
    %52 = vector.broadcast %cst_13 : f32 to vector<8x8xf32>
    %53 = arith.mulf %52, %51 : vector<8x8xf32>
    %54 = math.tanh %53 : vector<8x8xf32>
    %cst_14 = arith.constant 5.000000e-01 : f32
    %55 = vector.broadcast %cst_14 : f32 to vector<8x8xf32>
    %56 = arith.mulf %55, %54 : vector<8x8xf32>
    %cst_15 = arith.constant 5.000000e-01 : f32
    %57 = vector.broadcast %cst_15 : f32 to vector<8x8xf32>
    %58 = arith.addf %56, %57 : vector<8x8xf32>
    %c0_16 = arith.constant 0 : index
    %c0_17 = arith.constant 0 : index
    %59 = vector.load %arg3[%c0_16, %c0_17] : memref<8x8xf32, #tpu.memory_space<vmem>>, vector<8x8xf32>
    tpu.vector_store %arg3[%c0_16, %c0_17], %58 {strides = array<i32>} : memref<8x8xf32, #tpu.memory_space<vmem>>, vector<8x8xf32>,
    return
  }
  func.func @transform_0(%arg0: i32) -> (i32, i32) {
    %c0_i32 = arith.constant 0 : i32
    %c0_i32_0 = arith.constant 0 : i32
    return %arg0, %c0_i32 : i32, i32
  }
  func.func @transform_1(%arg0: i32) -> (i32, i32) {
    %c0_i32 = arith.constant 0 : i32
    %c0_i32_0 = arith.constant 0 : i32
    %c0_i32_1 = arith.constant 0 : i32
    return %c0_i32, %c0_i32_0 : i32, i32
  }
  func.func @transform_2(%arg0: i32) -> (i32, i32) {
    %c0_i32 = arith.constant 0 : i32
    %c0_i32_0 = arith.constant 0 : i32
    return %arg0, %c0_i32 : i32, i32
  }
}

</mosaic_0001>

<llo_original>
// kernel: tpu_custom_call.1
$region0: #{tpu_custom_call.1}
  #allocation0 [shape = 'u32[]', space=smem, size = 0x4, offset = 0x4, fixed_abs, tag = 'smem constant byte address 0x4 - core index']
  #allocation1 [shape = 'u32[144,128]{1,0:T(1,128)}', space=vmem, size = 0x12000, scoped, tag = 'internal scratch']
  %s0 = inlined_call_operand.hbm [shape: f32[8,16], index: 0, kind: input, shape index: {}]
  %s1 = inlined_call_operand.hbm [shape: f32[408,128], index: 1, kind: input, shape index: {}]
  %s2 = inlined_call_operand.hbm [shape: f32[8,8], index: 2, kind: output, shape index: {}]
  %s3 = sld [smem:[#allocation0]]
  $region26: #{tpu_custom_call.1} parent=0
    _
  %s5 = ssub.s32 1, %s3
  %s6 = scalar_select 0, %s5, %s3
  $region1: #{tpu_custom_call.1} parent=0
    #allocation2 [shape = 'u8[4096]{0}', space=vmem, size = 0x1000, scoped, tag = 'input window, operand 0, single buffered']
    #allocation3 [shape = 's32[1]{0}', space=sflag, size = 0x4, scoped, tag = 'scoped memory for tpu_custom_call.1']
    #allocation4 [shape = 's32[1]{0}', space=sflag, size = 0x4, scoped, tag = 'scoped memory for tpu_custom_call.1']
    #allocation5 [shape = 'u8[208896]{0}', space=vmem, size = 0x33000, scoped, tag = 'input window, operand 1, single buffered']
    #allocation6 [shape = 's32[1]{0}', space=sflag, size = 0x4, scoped, tag = 'scoped memory for tpu_custom_call.1']
    #allocation7 [shape = 'u8[4096]{0}', space=vmem, size = 0x1000, scoped, tag = 'output window, operand 0, single buffered']
    %7 = vsyncpa [#allocation3], 0
    %8 = vsyncpa [#allocation6], 0
    %9 = vsyncpa [#allocation4], 0
    // Predicated region
    $region2: #{tpu_custom_call.1} parent=1 // pred_check
      _
    $region3: #{tpu_custom_call.1} parent=1 // pred_check_branch
      %11 = sbr.rel (0) target = $region5
    $region4: #{tpu_custom_call.1} parent=1 // pred_region
      %s13 = ssub.s32 128, 128
      %14 = vsyncadd [#allocation3], %s13
      %s16 = sshll.u32 [#allocation2], 4
      %s17 = int_to_ptr.vmem [resolvable:$true] %s16
      %19 = dma.hbm_to_vmem [thread:$0]  %s0, 128, %s17, [#allocation3]
    $region5: #{tpu_custom_call.1} parent=1 // pred_fallthru
      _
    // Predicated region
    $region6: #{tpu_custom_call.1} parent=1 // pred_check
      _
    $region7: #{tpu_custom_call.1} parent=1 // pred_check_branch
      %21 = sbr.rel (0) target = $region9
    $region8: #{tpu_custom_call.1} parent=1 // pred_region
      %s23 = ssub.s32 6528, 6528
      %24 = vsyncadd [#allocation6], %s23
      %s25 = sshll.u32 [#allocation5], 4
      %s26 = int_to_ptr.vmem [resolvable:$true] %s25
      %31 = dma.hbm_to_vmem [thread:$0]  %s1, 6528, %s26, [#allocation6], 128, 128, 8
    $region9: #{tpu_custom_call.1} parent=1 // pred_fallthru
      _
    // Predicated region
    $region10: #{tpu_custom_call.1} parent=1 // pred_check
      _
    $region11: #{tpu_custom_call.1} parent=1 // pred_check_branch
      %33 = sbr.rel (0) target = $region13
    $region12: #{tpu_custom_call.1} parent=1 // pred_region
      %34 = dma.done [#allocation3], 128
    $region13: #{tpu_custom_call.1} parent=1 // pred_fallthru
      _
    // Predicated region
    $region14: #{tpu_custom_call.1} parent=1 // pred_check
      _
    $region15: #{tpu_custom_call.1} parent=1 // pred_check_branch
      %36 = sbr.rel (0) target = $region17
    $region16: #{tpu_custom_call.1} parent=1 // pred_region
      %37 = dma.done [#allocation6], 6528
    $region17: #{tpu_custom_call.1} parent=1 // pred_fallthru
      _
    %v38 = vld [vmem:[#allocation5 + $0x190] sm:$0xff]
    %v39 = vld [vmem:[#allocation2] sm:$0xff]
    %v40 = vld [vmem:[#allocation5] sm:$0xff]
    %v41 = vld [vmem:[#allocation5 + $0x8] sm:$0xff]
    %v42 = vlaneseq
    %v43 = vshrl.u32 %v42, 7
    %v44 = vsub.s32 0, %v43
    %v45 = vrot.slane %v38, %v44
    %vm46 = vcmask 130048
    %v48 = vsel %vm46, %v39, 0
    %50 = vmatprep.subr.mxu0 0.0
    %51 = vmatpush1.msra.mxu0 0.0
    %52 = vmatprep.subr.mxu0 0.0
    %53 = vmatpush1.msra.mxu0 0.0
    %54 = vmatprep.subr.mxu0 0.0
    %55 = vmatpush1.msra.mxu0 0.0
    %56 = vmatprep.subr.mxu0 0.0
    %57 = vmatpush1.msra.mxu0 0.0
    %58 = vmatprep.subr.mxu0 0.0
    %59 = vmatpush1.msra.mxu0 0.0
    %60 = vmatprep.subr.mxu0 0.0
    %61 = vmatpush1.msra.mxu0 0.0
    %62 = vmatprep.subr.mxu0 0.0
    %63 = vmatpush1.msra.mxu0 0.0
    %64 = vmatprep.subr.mxu0 0.0
    %65 = vmatpush1.msra.mxu0 0.0
    %66 = vmatprep.subr.mxu0 0.0
    %67 = vmatpush1.msra.mxu0 0.0
    %68 = vmatprep.subr.mxu0 0.0
    %69 = vmatpush1.msra.mxu0 0.0
    %70 = vmatprep.subr.mxu0 0.0
    %71 = vmatpush1.msra.mxu0 0.0
    %72 = vmatprep.subr.mxu0 0.0
    %73 = vmatpush1.msra.mxu0 0.0
    %74 = vmatprep.subr.mxu0 0.0
    %75 = vmatpush1.msra.mxu0 0.0
    %76 = vmatprep.subr.mxu0 0.0
    %77 = vmatpush1.msra.mxu0 0.0
    %78 = vmatprep.subr.mxu0 0.0
    %79 = vmatpush1.msra.mxu0 %v41
    %80 = vmatprep.subr.mxu0 0.0
    %81 = vmatpush1.msra.mxu0 %v40
    %82 = vmatprep.subr.mxu0 0.0
    %83 = vmatpush2.msra.mxu0 0.0
    %84 = vmatprep.subr.mxu0 0.0
    %85 = vmatpush2.msra.mxu0 0.0
    %86 = vmatprep.subr.mxu0 0.0
    %87 = vmatpush2.msra.mxu0 0.0
    %88 = vmatprep.subr.mxu0 0.0
    %89 = vmatpush2.msra.mxu0 0.0
    %90 = vmatprep.subr.mxu0 0.0
    %91 = vmatpush2.msra.mxu0 0.0
    %92 = vmatprep.subr.mxu0 0.0
    %93 = vmatpush2.msra.mxu0 0.0
    %94 = vmatprep.subr.mxu0 0.0
    %95 = vmatpush2.msra.mxu0 0.0
    %96 = vmatprep.subr.mxu0 0.0
    %97 = vmatpush2.msra.mxu0 0.0
    %98 = vmatprep.subr.mxu0 0.0
    %99 = vmatpush2.msra.mxu0 0.0
    %100 = vmatprep.subr.mxu0 0.0
    %101 = vmatpush2.msra.mxu0 0.0
    %102 = vmatprep.subr.mxu0 0.0
    %103 = vmatpush2.msra.mxu0 0.0
    %104 = vmatprep.subr.mxu0 0.0
    %105 = vmatpush2.msra.mxu0 0.0
    %106 = vmatprep.subr.mxu0 0.0
    %107 = vmatpush2.msra.mxu0 0.0
    %108 = vmatprep.subr.mxu0 0.0
    %109 = vmatpush2.msra.mxu0 0.0
    %110 = vmatprep.subr.mxu0 0.0
    %111 = vmatpush2.msra.mxu0 0.0
    %112 = vmatprep.subr.mxu0 0.0
    %113 = vmatpush2.msra.mxu0 0.0
    %114 = vmatprep.mubr.f32.mxu0 0.0
    %115 = vmatmul.mubr.f32.gmra.mxu0 %v48
    %v116 = vpop.f32.mrf.mxu0
    %v117 = vadd.f32 %v45, %v116
    %v118 = vpop.f32.mrf.mxu0
    %119 = vdwg.mxu0
    %v120 = vlaneseq
    %v121 = vshrl.u32 %v120, 7
    %v122 = vsub.s32 4, %v121
    %v123 = vrot.slane %v38, %v122
    %v124 = vmul.f32 %v117, %v123
    %v125 = vtanh.pop %v124
    %v126 = vlaneseq
    %v127 = vshrl.u32 %v126, 7
    %v128 = vsub.s32 5, %v127
    %v129 = vrot.slane %v38, %v128
    %v130 = vmul.f32 %v125, %v129
    %v131 = vlaneseq
    %v132 = vshrl.u32 %v131, 7
    %v133 = vsub.s32 6, %v132
    %v134 = vrot.slane %v38, %v133
    %v135 = vadd.f32 %v130, %v134
    %136 = vrot.lane.b32.xlu0 %v135, 64
    %v137 = vpop.permute.xlu0 %136
    %v138 = vmul.f32 %v135, %v137
    %v139 = vtanh.pop %v138
    %140 = vrot.lane.b32.xlu0 %v135, 32
    %v141 = vpop.permute.xlu0 %140
    %v142 = vmul.f32 %v141, %v139
    %v143 = vld [vmem:[#allocation5 + $0x10] sm:$0xff]
    %v144 = vld [vmem:[#allocation5 + $0x18] sm:$0xff]
    %v145 = vld [vmem:[#allocation5 + $0x20] sm:$0xff]
    %v146 = vld [vmem:[#allocation5 + $0x28] sm:$0xff]
    %v147 = vld [vmem:[#allocation5 + $0x30] sm:$0xff]
    %v148 = vld [vmem:[#allocation5 + $0x38] sm:$0xff]
    %v149 = vld [vmem:[#allocation5 + $0x40] sm:$0xff]
    %v150 = vld [vmem:[#allocation5 + $0x48] sm:$0xff]
    %v151 = vld [vmem:[#allocation5 + $0x50] sm:$0xff]
    %v152 = vld [vmem:[#allocation5 + $0x58] sm:$0xff]
    %v153 = vld [vmem:[#allocation5 + $0x60] sm:$0xff]
    %v154 = vld [vmem:[#allocation5 + $0x68] sm:$0xff]
    %v155 = vld [vmem:[#allocation5 + $0x70] sm:$0xff]
    %v156 = vld [vmem:[#allocation5 + $0x78] sm:$0xff]
    %v157 = vld [vmem:[#allocation5 + $0x80] sm:$0xff]
    %v158 = vld [vmem:[#allocation5 + $0x88] sm:$0xff]
    %v159 = vlaneseq
    %v160 = vshrl.u32 %v159, 7
    %v161 = vsub.s32 1, %v160
    %v162 = vrot.slane %v38, %v161
    %163 = vmatprep.subr.mxu0 0.0
    %164 = vmatpush1.msra.mxu0 %v158
    %165 = vmatprep.subr.mxu0 0.0
    %166 = vmatpush1.msra.mxu0 %v157
    %167 = vmatprep.subr.mxu0 0.0
    %168 = vmatpush1.msra.mxu0 %v156
    %169 = vmatprep.subr.mxu0 0.0
    %170 = vmatpush1.msra.mxu0 %v155
    %171 = vmatprep.subr.mxu0 0.0
    %172 = vmatpush1.msra.mxu0 %v154
    %173 = vmatprep.subr.mxu0 0.0
    %174 = vmatpush1.msra.mxu0 %v153
    %175 = vmatprep.subr.mxu0 0.0
    %176 = vmatpush1.msra.mxu0 %v152
    %177 = vmatprep.subr.mxu0 0.0
    %178 = vmatpush1.msra.mxu0 %v151
    %179 = vmatprep.subr.mxu0 0.0
    %180 = vmatpush1.msra.mxu0 %v150
    %181 = vmatprep.subr.mxu0 0.0
    %182 = vmatpush1.msra.mxu0 %v149
    %183 = vmatprep.subr.mxu0 0.0
    %184 = vmatpush1.msra.mxu0 %v148
    %185 = vmatprep.subr.mxu0 0.0
    %186 = vmatpush1.msra.mxu0 %v147
    %187 = vmatprep.subr.mxu0 0.0
    %188 = vmatpush1.msra.mxu0 %v146
    %189 = vmatprep.subr.mxu0 0.0
    %190 = vmatpush1.msra.mxu0 %v145
    %191 = vmatprep.subr.mxu0 0.0
    %192 = vmatpush1.msra.mxu0 %v144
    %193 = vmatprep.subr.mxu0 0.0
    %194 = vmatpush1.msra.mxu0 %v143
    %195 = vmatprep.subr.mxu0 0.0
    %196 = vmatpush2.msra.mxu0 0.0
    %197 = vmatprep.subr.mxu0 0.0
    %198 = vmatpush2.msra.mxu0 0.0
    %199 = vmatprep.subr.mxu0 0.0
    %200 = vmatpush2.msra.mxu0 0.0
    %201 = vmatprep.subr.mxu0 0.0
    %202 = vmatpush2.msra.mxu0 0.0
    %203 = vmatprep.subr.mxu0 0.0
    %204 = vmatpush2.msra.mxu0 0.0
    %205 = vmatprep.subr.mxu0 0.0
    %206 = vmatpush2.msra.mxu0 0.0
    %207 = vmatprep.subr.mxu0 0.0
    %208 = vmatpush2.msra.mxu0 0.0
    %209 = vmatprep.subr.mxu0 0.0
    %210 = vmatpush2.msra.mxu0 0.0
    %211 = vmatprep.subr.mxu0 0.0
    %212 = vmatpush2.msra.mxu0 0.0
    %213 = vmatprep.subr.mxu0 0.0
    %214 = vmatpush2.msra.mxu0 0.0
    %215 = vmatprep.subr.mxu0 0.0
    %216 = vmatpush2.msra.mxu0 0.0
    %217 = vmatprep.subr.mxu0 0.0
    %218 = vmatpush2.msra.mxu0 0.0
    %219 = vmatprep.subr.mxu0 0.0
    %220 = vmatpush2.msra.mxu0 0.0
    %221 = vmatprep.subr.mxu0 0.0
    %222 = vmatpush2.msra.mxu0 0.0
    %223 = vmatprep.subr.mxu0 0.0
    %224 = vmatpush2.msra.mxu0 0.0
    %225 = vmatprep.subr.mxu0 0.0
    %226 = vmatpush2.msra.mxu0 0.0
    %227 = vmatprep.mubr.f32.mxu0 0.0
    %228 = vmatmul.mubr.f32.gmra.mxu0 %v142
    %v229 = vpop.f32.mrf.mxu0
    %v230 = vadd.f32 %v162, %v229
    %v231 = vpop.f32.mrf.mxu0
    %232 = vdwg.mxu0
    %v233 = vmul.f32 %v230, %v123
    %v234 = vtanh.pop %v233
    %v235 = vmul.f32 %v234, %v129
    %v236 = vadd.f32 %v235, %v134
    %237 = vrot.lane.b32.xlu0 %v236, 64
    %v238 = vpop.permute.xlu0 %237
    %v239 = vmul.f32 %v236, %v238
    %v240 = vtanh.pop %v239
    %241 = vrot.lane.b32.xlu0 %v236, 32
    %v242 = vpop.permute.xlu0 %241
    %v243 = vmul.f32 %v242, %v240
    %v244 = vld [vmem:[#allocation5 + $0x90] sm:$0xff]
    %v245 = vld [vmem:[#allocation5 + $0x98] sm:$0xff]
    %v246 = vld [vmem:[#allocation5 + $0xa0] sm:$0xff]
    %v247 = vld [vmem:[#allocation5 + $0xa8] sm:$0xff]
    %v248 = vld [vmem:[#allocation5 + $0xb0] sm:$0xff]
    %v249 = vld [vmem:[#allocation5 + $0xb8] sm:$0xff]
    %v250 = vld [vmem:[#allocation5 + $0xc0] sm:$0xff]
    %v251 = vld [vmem:[#allocation5 + $0xc8] sm:$0xff]
    %v252 = vld [vmem:[#allocation5 + $0xd0] sm:$0xff]
    %v253 = vld [vmem:[#allocation5 + $0xd8] sm:$0xff]
    %v254 = vld [vmem:[#allocation5 + $0xe0] sm:$0xff]
    %v255 = vld [vmem:[#allocation5 + $0xe8] sm:$0xff]
    %v256 = vld [vmem:[#allocation5 + $0xf0] sm:$0xff]
    %v257 = vld [vmem:[#allocation5 + $0xf8] sm:$0xff]
    %v258 = vld [vmem:[#allocation5 + $0x100] sm:$0xff]
    %v259 = vld [vmem:[#allocation5 + $0x108] sm:$0xff]
    %v260 = vlaneseq
    %v261 = vshrl.u32 %v260, 7
    %v262 = vsub.s32 2, %v261
    %v263 = vrot.slane %v38, %v262
    %264 = vmatprep.subr.mxu0 0.0
    %265 = vmatpush1.msra.mxu0 %v259
    %266 = vmatprep.subr.mxu0 0.0
    %267 = vmatpush1.msra.mxu0 %v258
    %268 = vmatprep.subr.mxu0 0.0
    %269 = vmatpush1.msra.mxu0 %v257
    %270 = vmatprep.subr.mxu0 0.0
    %271 = vmatpush1.msra.mxu0 %v256
    %272 = vmatprep.subr.mxu0 0.0
    %273 = vmatpush1.msra.mxu0 %v255
    %274 = vmatprep.subr.mxu0 0.0
    %275 = vmatpush1.msra.mxu0 %v254
    %276 = vmatprep.subr.mxu0 0.0
    %277 = vmatpush1.msra.mxu0 %v253
    %278 = vmatprep.subr.mxu0 0.0
    %279 = vmatpush1.msra.mxu0 %v252
    %280 = vmatprep.subr.mxu0 0.0
    %281 = vmatpush1.msra.mxu0 %v251
    %282 = vmatprep.subr.mxu0 0.0
    %283 = vmatpush1.msra.mxu0 %v250
    %284 = vmatprep.subr.mxu0 0.0
    %285 = vmatpush1.msra.mxu0 %v249
    %286 = vmatprep.subr.mxu0 0.0
    %287 = vmatpush1.msra.mxu0 %v248
    %288 = vmatprep.subr.mxu0 0.0
    %289 = vmatpush1.msra.mxu0 %v247
    %290 = vmatprep.subr.mxu0 0.0
    %291 = vmatpush1.msra.mxu0 %v246
    %292 = vmatprep.subr.mxu0 0.0
    %293 = vmatpush1.msra.mxu0 %v245
    %294 = vmatprep.subr.mxu0 0.0
    %295 = vmatpush1.msra.mxu0 %v244
    %296 = vmatprep.subr.mxu0 0.0
    %297 = vmatpush2.msra.mxu0 0.0
    %298 = vmatprep.subr.mxu0 0.0
    %299 = vmatpush2.msra.mxu0 0.0
    %300 = vmatprep.subr.mxu0 0.0
    %301 = vmatpush2.msra.mxu0 0.0
    %302 = vmatprep.subr.mxu0 0.0
    %303 = vmatpush2.msra.mxu0 0.0
    %304 = vmatprep.subr.mxu0 0.0
    %305 = vmatpush2.msra.mxu0 0.0
    %306 = vmatprep.subr.mxu0 0.0
    %307 = vmatpush2.msra.mxu0 0.0
    %308 = vmatprep.subr.mxu0 0.0
    %309 = vmatpush2.msra.mxu0 0.0
    %310 = vmatprep.subr.mxu0 0.0
    %311 = vmatpush2.msra.mxu0 0.0
    %312 = vmatprep.subr.mxu0 0.0
    %313 = vmatpush2.msra.mxu0 0.0
    %314 = vmatprep.subr.mxu0 0.0
    %315 = vmatpush2.msra.mxu0 0.0
    %316 = vmatprep.subr.mxu0 0.0
    %317 = vmatpush2.msra.mxu0 0.0
    %318 = vmatprep.subr.mxu0 0.0
    %319 = vmatpush2.msra.mxu0 0.0
    %320 = vmatprep.subr.mxu0 0.0
    %321 = vmatpush2.msra.mxu0 0.0
    %322 = vmatprep.subr.mxu0 0.0
    %323 = vmatpush2.msra.mxu0 0.0
    %324 = vmatprep.subr.mxu0 0.0
    %325 = vmatpush2.msra.mxu0 0.0
    %326 = vmatprep.subr.mxu0 0.0
    %327 = vmatpush2.msra.mxu0 0.0
    %328 = vmatprep.mubr.f32.mxu0 0.0
    %329 = vmatmul.mubr.f32.gmra.mxu0 %v243
    %v330 = vpop.f32.mrf.mxu0
    %v331 = vadd.f32 %v263, %v330
    %v332 = vpop.f32.mrf.mxu0
    %333 = vdwg.mxu0
    %v334 = vmax.f32 %v331, 0.0
    %v335 = vld [vmem:[#allocation5 + $0x110] sm:$0xff]
    %v336 = vld [vmem:[#allocation5 + $0x118] sm:$0xff]
    %v337 = vld [vmem:[#allocation5 + $0x120] sm:$0xff]
    %v338 = vld [vmem:[#allocation5 + $0x128] sm:$0xff]
    %v339 = vld [vmem:[#allocation5 + $0x130] sm:$0xff]
    %v340 = vld [vmem:[#allocation5 + $0x138] sm:$0xff]
    %v341 = vld [vmem:[#allocation5 + $0x140] sm:$0xff]
    %v342 = vld [vmem:[#allocation5 + $0x148] sm:$0xff]
    %v343 = vld [vmem:[#allocation5 + $0x150] sm:$0xff]
    %v344 = vld [vmem:[#allocation5 + $0x158] sm:$0xff]
    %v345 = vld [vmem:[#allocation5 + $0x160] sm:$0xff]
    %v346 = vld [vmem:[#allocation5 + $0x168] sm:$0xff]
    %v347 = vld [vmem:[#allocation5 + $0x170] sm:$0xff]
    %v348 = vld [vmem:[#allocation5 + $0x178] sm:$0xff]
    %v349 = vld [vmem:[#allocation5 + $0x180] sm:$0xff]
    %v350 = vld [vmem:[#allocation5 + $0x188] sm:$0xff]
    %v351 = vlaneseq
    %v352 = vshrl.u32 %v351, 7
    %v353 = vsub.s32 3, %v352
    %v354 = vrot.slane %v38, %v353
    %355 = vmatprep.subr.mxu0 0.0
    %356 = vmatpush1.msra.mxu0 %v350
    %357 = vmatprep.subr.mxu0 0.0
    %358 = vmatpush1.msra.mxu0 %v349
    %359 = vmatprep.subr.mxu0 0.0
    %360 = vmatpush1.msra.mxu0 %v348
    %361 = vmatprep.subr.mxu0 0.0
    %362 = vmatpush1.msra.mxu0 %v347
    %363 = vmatprep.subr.mxu0 0.0
    %364 = vmatpush1.msra.mxu0 %v346
    %365 = vmatprep.subr.mxu0 0.0
    %366 = vmatpush1.msra.mxu0 %v345
    %367 = vmatprep.subr.mxu0 0.0
    %368 = vmatpush1.msra.mxu0 %v344
    %369 = vmatprep.subr.mxu0 0.0
    %370 = vmatpush1.msra.mxu0 %v343
    %371 = vmatprep.subr.mxu0 0.0
    %372 = vmatpush1.msra.mxu0 %v342
    %373 = vmatprep.subr.mxu0 0.0
    %374 = vmatpush1.msra.mxu0 %v341
    %375 = vmatprep.subr.mxu0 0.0
    %376 = vmatpush1.msra.mxu0 %v340
    %377 = vmatprep.subr.mxu0 0.0
    %378 = vmatpush1.msra.mxu0 %v339
    %379 = vmatprep.subr.mxu0 0.0
    %380 = vmatpush1.msra.mxu0 %v338
    %381 = vmatprep.subr.mxu0 0.0
    %382 = vmatpush1.msra.mxu0 %v337
    %383 = vmatprep.subr.mxu0 0.0
    %384 = vmatpush1.msra.mxu0 %v336
    %385 = vmatprep.subr.mxu0 0.0
    %386 = vmatpush1.msra.mxu0 %v335
    %387 = vmatprep.subr.mxu0 0.0
    %388 = vmatpush2.msra.mxu0 0.0
    %389 = vmatprep.subr.mxu0 0.0
    %390 = vmatpush2.msra.mxu0 0.0
    %391 = vmatprep.subr.mxu0 0.0
    %392 = vmatpush2.msra.mxu0 0.0
    %393 = vmatprep.subr.mxu0 0.0
    %394 = vmatpush2.msra.mxu0 0.0
    %395 = vmatprep.subr.mxu0 0.0
    %396 = vmatpush2.msra.mxu0 0.0
    %397 = vmatprep.subr.mxu0 0.0
    %398 = vmatpush2.msra.mxu0 0.0
    %399 = vmatprep.subr.mxu0 0.0
    %400 = vmatpush2.msra.mxu0 0.0
    %401 = vmatprep.subr.mxu0 0.0
    %402 = vmatpush2.msra.mxu0 0.0
    %403 = vmatprep.subr.mxu0 0.0
    %404 = vmatpush2.msra.mxu0 0.0
    %405 = vmatprep.subr.mxu0 0.0
    %406 = vmatpush2.msra.mxu0 0.0
    %407 = vmatprep.subr.mxu0 0.0
    %408 = vmatpush2.msra.mxu0 0.0
    %409 = vmatprep.subr.mxu0 0.0
    %410 = vmatpush2.msra.mxu0 0.0
    %411 = vmatprep.subr.mxu0 0.0
    %412 = vmatpush2.msra.mxu0 0.0
    %413 = vmatprep.subr.mxu0 0.0
    %414 = vmatpush2.msra.mxu0 0.0
    %415 = vmatprep.subr.mxu0 0.0
    %416 = vmatpush2.msra.mxu0 0.0
    %417 = vmatprep.subr.mxu0 0.0
    %418 = vmatpush2.msra.mxu0 0.0
    %419 = vmatprep.mubr.f32.mxu0 0.0
    %420 = vmatmul.mubr.f32.gmra.mxu0 %v334
    %v421 = vpop.f32.mrf.mxu0
    %v422 = vadd.f32 %v354, %v421
    %v423 = vpop.f32.mrf.mxu0
    %424 = vdwg.mxu0
    %v425 = vmul.f32 %v422, 0.5
    %v426 = vtanh.pop %v425
    %v427 = vmul.f32 %v426, 0.5
    %v428 = vadd.f32 %v427, 0.5
    %vm429 = vcmask 64512
    %430 = vst.msk [vmem:[#allocation7] sm:$0xff] %vm429, %v428
    // Predicated region
    $region18: #{tpu_custom_call.1} parent=1 // pred_check
      _
    $region19: #{tpu_custom_call.1} parent=1 // pred_check_branch
      %432 = sbr.rel (0) target = $region21
    $region20: #{tpu_custom_call.1} parent=1 // pred_region
      %s434 = ssub.s32 128, 128
      %435 = vsyncadd [#allocation4], %s434
      %s437 = sshll.u32 [#allocation7], 4
      %s438 = int_to_ptr.vmem [resolvable:$true] %s437
      %440 = dma.vmem_to_hbm [thread:$0]  %s438, 128, %s2, [#allocation4]
    $region21: #{tpu_custom_call.1} parent=1 // pred_fallthru
      _
    // Predicated region
    $region22: #{tpu_custom_call.1} parent=1 // pred_check
      _
    $region23: #{tpu_custom_call.1} parent=1 // pred_check_branch
      %442 = sbr.rel (0) target = $region25
    $region24: #{tpu_custom_call.1} parent=1 // pred_region
      %443 = dma.done [#allocation4], 128
    $region25: #{tpu_custom_call.1} parent=1 // pred_fallthru
      _
    %444 = vsyncpa [#allocation3], 1
    %445 = vsyncpa [#allocation6], 1
    %446 = vsyncpa [#allocation4], 1

</llo_original>
